<compile_context>
chip_gen: v5e
topology: v5e:2x2
jax: 0.10.0
libtpu: 0.0.40
codegen_flags: <defaults>
</compile_context>

<pallas_src>
import functools

import jax
import jax.numpy as jnp
from jax import lax
from jax.experimental import pallas as pl
from jax.experimental.pallas import tpu as pltpu


# ----------------------------- kernels --------------------------------------


def _layernorm_kernel(x_ref, g_ref, b_ref, o_ref, *, eps: float, n_feat: int):
    # x_ref: (block_rows, features) tile in VMEM; g_ref/b_ref: (1, features) f32
    x = x_ref[...].astype(jnp.float32)

    mean = jnp.mean(x, axis=-1, keepdims=True)
    d = x - mean
    # torch.std() is unbiased (Bessel-corrected): divide by N-1.
    inv_nm1 = jnp.float32(1.0 / max(n_feat - 1, 1))
    var = jnp.sum(d * d, axis=-1, keepdims=True) * inv_nm1
    inv = lax.rsqrt(var + jnp.float32(eps))

    o_ref[...] = (g_ref[...] * (d * inv) + b_ref[...]).astype(o_ref.dtype)


def _layernorm_packed_kernel(x_ref, s_ref, g_ref, b_ref, o_ref, *,
                             eps: float, n_feat: int):
    # Lane-dense path for small feature dims: G = P // n_feat original rows are
    # packed into each 128-lane row.  s_ref is a (P, P) block-diagonal matrix of
    # ones (FxF blocks), so x @ s gives each lane the sum over its own segment
    # (segmented reduction, broadcast back within the segment) on the MXU.
    x = x_ref[...].astype(jnp.float32)
    seg = s_ref[...]

    mean = jnp.dot(x, seg, preferred_element_type=jnp.float32) * jnp.float32(
        1.0 / n_feat)
    d = x - mean
    inv_nm1 = jnp.float32(1.0 / max(n_feat - 1, 1))
    var = jnp.dot(d * d, seg, preferred_element_type=jnp.float32) * inv_nm1
    inv = lax.rsqrt(var + jnp.float32(eps))

    o_ref[...] = (g_ref[...] * (d * inv) + b_ref[...]).astype(o_ref.dtype)


# ----------------------------- tiling policy --------------------------------


def _vmem_capacity_bytes() -> int:
    try:
        cap = int(pltpu.get_tpu_info().vmem_capacity_bytes)
        if cap > 0:
            return cap
    except Exception:
        pass
    return 64 << 20  # conservative fallback (v7x-sized)


def _choose_block_rows(rows: int, features: int, itemsize: int,
                       vmem_budget_bytes: int) -> int:
    """Pick a row tile from a VMEM byte budget (no arbitrary row cap).

    Budget model per row of the tile:
      - 4x pipelined input/output buffers in the I/O dtype, plus
      - ~4 full-width f32 compute temporaries (x_f32, d, d*d, seg-sum/var).
    """
    row_align = 16 if itemsize < 4 else 8  # bf16/int8 pack along sublanes
    per_row = features * itemsize * 4 + features * 4 * 4
    br = max(vmem_budget_bytes // max(per_row, 1), row_align)
    br = (br // row_align) * row_align

    if br >= rows:
        # Whole array fits in a single tile.  Still split into >=2 row blocks
        # (when alignment allows) so a 2-TensorCore part (v7x) can shard the
        # "parallel" grid axis; otherwise one full-array block.
        half = ((rows + 1) // 2 + row_align - 1) // row_align * row_align
        if half < rows:
            return half
        return rows
    return br


# ----------------------------- wrapper ---------------------------------------


def layer_norm(x, gamma, beta, *, eps=1e-6, block_rows=None):
    """LayerNorm over the last axis of x, matching the PyTorch module.

    x:     (..., features)
    gamma: (features,)   -- a_2
    beta:  (features,)   -- b_2
    """
    orig_shape = x.shape
    features = orig_shape[-1]
    rows = 1
    for s in orig_shape[:-1]:
        rows *= s

    x2d = x.reshape(rows, features)
    itemsize = x.dtype.itemsize

    # Per-generation VMEM sizing.
    vmem_cap = _vmem_capacity_bytes()
    big_vmem = vmem_cap >= (96 << 20)           # v5e/v6e: 128 MiB; v7x: 64 MiB
    vmem_budget = (72 << 20) if big_vmem else (32 << 20)
    vmem_ceiling = (vmem_cap * 3) // 5          # ~76 MiB / ~38 MiB

    # Lane-dense packing for small feature widths.
    pack = (features < 128) and (128 % features == 0)
    if pack:
        group = 128 // features
        pwidth = group * features               # == 128
        padded_rows = -(-rows // group) * group
        if padded_rows != rows:
            x2d = jnp.pad(x2d, ((0, padded_rows - rows), (0, 0)))
        xk = x2d.reshape(padded_rows // group, pwidth)
        gk = jnp.tile(gamma.astype(jnp.float32), (group,)).reshape(1, pwidth)
        bk = jnp.tile(beta.astype(jnp.float32), (group,)).reshape(1, pwidth)
        lane = jnp.arange(pwidth)
        seg = (lane[:, None] // features == lane[None, :] // features).astype(
            jnp.float32)                        # (P, P) block-diag ones
        krows, kfeat = padded_rows // group, pwidth
    else:
        xk = x2d
        gk = gamma.astype(jnp.float32).reshape(1, features)
        bk = beta.astype(jnp.float32).reshape(1, features)
        seg = None
        krows, kfeat = rows, features

    if block_rows is None:
        block_rows = _choose_block_rows(krows, kfeat, itemsize, vmem_budget)
    block_rows = min(block_rows, krows)

    grid = (pl.cdiv(krows, block_rows),)

    # Scoped-VMEM limit: pipelined buffers + f32 temps + params + headroom,
    # clamped per generation.
    tile_bytes = block_rows * kfeat * itemsize
    needed = (4 * tile_bytes
              + 4 * block_rows * kfeat * 4
              + 4 * kfeat * 4
              + (kfeat * kfeat * 4 if pack else 0)
              + (2 << 20))
    vmem_limit = int(min(max(needed, 32 << 20), vmem_ceiling))

    x_spec = pl.BlockSpec((block_rows, kfeat), lambda i: (i, 0))
    vec_spec = pl.BlockSpec((1, kfeat), lambda i: (0, 0))
    out_spec = pl.BlockSpec((block_rows, kfeat), lambda i: (i, 0))

    if pack:
        kernel = functools.partial(_layernorm_packed_kernel,
                                   eps=float(eps), n_feat=features)
        in_specs = [x_spec,
                    pl.BlockSpec((kfeat, kfeat), lambda i: (0, 0)),
                    vec_spec, vec_spec]
        args = (xk, seg, gk, bk)
    else:
        kernel = functools.partial(_layernorm_kernel,
                                   eps=float(eps), n_feat=features)
        in_specs = [x_spec, vec_spec, vec_spec]
        args = (xk, gk, bk)

    out = pl.pallas_call(
        kernel,
        out_shape=jax.ShapeDtypeStruct((krows, kfeat), x.dtype),
        grid_spec=pltpu.PrefetchScalarGridSpec(
            num_scalar_prefetch=0,
            grid=grid,
            in_specs=in_specs,
            out_specs=out_spec,
        ),
        compiler_params=pltpu.CompilerParams(
            dimension_semantics=("parallel",),
            vmem_limit_bytes=vmem_limit,
        ),
    )(*args)

    if pack:
        out = out.reshape(-1, features)[:rows]
    return out.reshape(orig_shape)


# ----------------------------- demo / check ---------------------------------


if __name__ == "__main__":
    # Small shapes implied by the module: (batch=2, seq=8, hidden=32)
    batch, seq, hidden = 2, 8, 32
    key = jax.random.PRNGKey(0)
    x = jax.random.normal(key, (batch, seq, hidden), dtype=jnp.float32)

    # Deterministic parameter init, matching nn.Parameter(torch.ones/zeros)
    gamma = jnp.ones((hidden,), dtype=jnp.float32)   # a_2
    beta = jnp.zeros((hidden,), dtype=jnp.float32)   # b_2

    out = layer_norm(x, gamma, beta, eps=1e-6)
    jax.block_until_ready(out)

    # Reference check (plain JAX, same unbiased-std + eps-on-variance semantics)
    mean = jnp.mean(x, axis=-1, keepdims=True)
    var = jnp.sum((x - mean) ** 2, axis=-1, keepdims=True) / (hidden - 1)
    ref = gamma * ((x - mean) / jnp.sqrt(var + 1e-6)) + beta
    assert jnp.allclose(out, ref, atol=1e-5, rtol=1e-5)

    print("KERNEL_OK")
</pallas_src>

<mosaic_0001>
module attributes {stable_mosaic.version = 11 : i64} {
  func.func @_layernorm_packed_kernel(%arg0: i32, %arg1: memref<4x128xf32, #tpu.memory_space<vmem>>, %arg2: memref<128x128xf32, #tpu.memory_space<vmem>>, %arg3: memref<1x128xf32, #tpu.memory_space<vmem>>, %arg4: memref<1x128xf32, #tpu.memory_space<vmem>>, %arg5: memref<4x128xf32, #tpu.memory_space<vmem>>) attributes {dimension_semantics = [#tpu.dimension_semantics<parallel>], iteration_bounds = array<i64: 1>, scalar_prefetch = 0 : i64, scratch_operands = 0 : i64, tpu.core_type = #tpu.core_type<tc>, window_params = [{transform_indices = @transform_0, window_bounds = array<i64: 4, 128>}, {pipeline_mode = #tpu.pipeline_mode<synchronous>, transform_indices = @transform_1, window_bounds = array<i64: 128, 128>}, {pipeline_mode = #tpu.pipeline_mode<synchronous>, transform_indices = @transform_2, window_bounds = array<i64: 1, 128>}, {pipeline_mode = #tpu.pipeline_mode<synchronous>, transform_indices = @transform_3, window_bounds = array<i64: 1, 128>}, {transform_indices = @transform_4, window_bounds = array<i64: 4, 128>}]} {
    %c0 = arith.constant 0 : index
    %c0_0 = arith.constant 0 : index
    %0 = vector.load %arg1[%c0, %c0_0] : memref<4x128xf32, #tpu.memory_space<vmem>>, vector<4x128xf32>
    %c0_1 = arith.constant 0 : index
    %c0_2 = arith.constant 0 : index
    %1 = vector.load %arg2[%c0_1, %c0_2] : memref<128x128xf32, #tpu.memory_space<vmem>>, vector<128x128xf32>
    %cst = arith.constant dense<0.000000e+00> : vector<4x128xf32>
    %2 = tpu.matmul %0, %1, %cst {dimension_numbers = #tpu.dot_dimension_numbers<[1], [0], [0], [1], [0, 0, 1, 1], [], []>} : vector<4x128xf32>, vector<128x128xf32>, vector<4x128xf32> -> vector<4x128xf32>
    %cst_3 = arith.constant 3.125000e-02 : f32
    %3 = vector.broadcast %cst_3 : f32 to vector<4x128xf32>
    %4 = arith.mulf %2, %3 : vector<4x128xf32>
    %5 = arith.subf %0, %4 : vector<4x128xf32>
    %6 = arith.mulf %5, %5 : vector<4x128xf32>
    %cst_4 = arith.constant dense<0.000000e+00> : vector<4x128xf32>
    %7 = tpu.matmul %6, %1, %cst_4 {dimension_numbers = #tpu.dot_dimension_numbers<[1], [0], [0], [1], [0, 0, 1, 1], [], []>} : vector<4x128xf32>, vector<128x128xf32>, vector<4x128xf32> -> vector<4x128xf32>
    %cst_5 = arith.constant 0.0322580636 : f32
    %8 = vector.broadcast %cst_5 : f32 to vector<4x128xf32>
    %9 = arith.mulf %7, %8 : vector<4x128xf32>
    %cst_6 = arith.constant 9.99999997E-7 : f32
    %10 = vector.broadcast %cst_6 : f32 to vector<4x128xf32>
    %11 = arith.addf %9, %10 : vector<4x128xf32>
    %12 = math.rsqrt %11 : vector<4x128xf32>
    %c0_7 = arith.constant 0 : index
    %c0_8 = arith.constant 0 : index
    %13 = vector.load %arg3[%c0_7, %c0_8] : memref<1x128xf32, #tpu.memory_space<vmem>>, vector<1x128xf32>
    %14 = arith.mulf %5, %12 : vector<4x128xf32>
    %15 = vector.broadcast %13 : vector<1x128xf32> to vector<4x128xf32>
    %16 = arith.mulf %15, %14 : vector<4x128xf32>
    %c0_9 = arith.constant 0 : index
    %c0_10 = arith.constant 0 : index
    %17 = vector.load %arg4[%c0_9, %c0_10] : memref<1x128xf32, #tpu.memory_space<vmem>>, vector<1x128xf32>
    %18 = vector.broadcast %17 : vector<1x128xf32> to vector<4x128xf32>
    %19 = arith.addf %16, %18 : vector<4x128xf32>
    %c0_11 = arith.constant 0 : index
    %c0_12 = arith.constant 0 : index
    %20 = vector.load %arg5[%c0_11, %c0_12] : memref<4x128xf32, #tpu.memory_space<vmem>>, vector<4x128xf32>
    tpu.vector_store %arg5[%c0_11, %c0_12], %19 {strides = array<i32>} : memref<4x128xf32, #tpu.memory_space<vmem>>, vector<4x128xf32>,
    return
  }
  func.func @transform_0(%arg0: i32) -> (i32, i32) {
    %c0_i32 = arith.constant 0 : i32
    %c0_i32_0 = arith.constant 0 : i32
    return %arg0, %c0_i32 : i32, i32
  }
  func.func @transform_1(%arg0: i32) -> (i32, i32) {
    %c0_i32 = arith.constant 0 : i32
    %c0_i32_0 = arith.constant 0 : i32
    %c0_i32_1 = arith.constant 0 : i32
    return %c0_i32, %c0_i32_0 : i32, i32
  }
  func.func @transform_2(%arg0: i32) -> (i32, i32) {
    %c0_i32 = arith.constant 0 : i32
    %c0_i32_0 = arith.constant 0 : i32
    %c0_i32_1 = arith.constant 0 : i32
    return %c0_i32, %c0_i32_0 : i32, i32
  }
  func.func @transform_3(%arg0: i32) -> (i32, i32) {
    %c0_i32 = arith.constant 0 : i32
    %c0_i32_0 = arith.constant 0 : i32
    %c0_i32_1 = arith.constant 0 : i32
    return %c0_i32, %c0_i32_0 : i32, i32
  }
  func.func @transform_4(%arg0: i32) -> (i32, i32) {
    %c0_i32 = arith.constant 0 : i32
    %c0_i32_0 = arith.constant 0 : i32
    return %arg0, %c0_i32 : i32, i32
  }
}

</mosaic_0001>

<llo_original>
// kernel: tpu_custom_call.1
$region0: #{tpu_custom_call.1}
  #allocation0 [shape = 'u32[]', space=smem, size = 0x4, offset = 0x4, fixed_abs, tag = 'smem constant byte address 0x4 - core index']
  #allocation1 [shape = 'u32[72,128]{1,0:T(1,128)}', space=vmem, size = 0x9000, scoped, tag = 'internal scratch']
  %s0 = inlined_call_operand.hbm [shape: f32[4,128], index: 0, kind: input, shape index: {}]
  %s1 = inlined_call_operand.hbm [shape: f32[128,128], index: 1, kind: input, shape index: {}]
  %s2 = inlined_call_operand.vmem [shape: f32[1,128], index: 2, kind: input, shape index: {}]
  %s3 = inlined_call_operand.vmem [shape: f32[1,128], index: 3, kind: input, shape index: {}]
  %s4 = inlined_call_operand.hbm [shape: f32[4,128], index: 4, kind: output, shape index: {}]
  %s5 = sld [smem:[#allocation0]]
  $region34: #{tpu_custom_call.1} parent=0
    _
  %s7 = ssub.s32 1, %s5
  %s8 = scalar_select 0, %s7, %s5
  $region1: #{tpu_custom_call.1} parent=0
    #allocation2 [shape = 'u8[2048]{0}', space=vmem, size = 0x800, scoped, tag = 'input window, operand 0, single buffered']
    #allocation3 [shape = 's32[1]{0}', space=sflag, size = 0x4, scoped, tag = 'scoped memory for tpu_custom_call.1']
    #allocation4 [shape = 's32[1]{0}', space=sflag, size = 0x4, scoped, tag = 'scoped memory for tpu_custom_call.1']
    #allocation5 [shape = 'u8[65536]{0}', space=vmem, size = 0x10000, scoped, tag = 'input window, operand 1, single buffered']
    #allocation6 [shape = 's32[1]{0}', space=sflag, size = 0x4, scoped, tag = 'scoped memory for tpu_custom_call.1']
    #allocation7 [shape = 'u8[2048]{0}', space=vmem, size = 0x800, scoped, tag = 'output window, operand 0, single buffered']
    %9 = vsyncpa [#allocation3], 0
    %10 = vsyncpa [#allocation6], 0
    %11 = vsyncpa [#allocation4], 0
    // Predicated region
    $region2: #{tpu_custom_call.1} parent=1 // pred_check
      _
    $region3: #{tpu_custom_call.1} parent=1 // pred_check_branch
      %13 = sbr.rel (0) target = $region5
    $region4: #{tpu_custom_call.1} parent=1 // pred_region
      %15 = vsyncadd [#allocation3], 0
      %s17 = sshll.u32 %s0, 4
      %s18 = int_to_ptr.hbm [resolvable:$true] %s17
      %s19 = sshll.u32 [#allocation2], 4
      %s20 = int_to_ptr.vmem [resolvable:$true] %s19
      %22 = dma.hbm_to_vmem [thread:$0]  %s18, 64, %s20, [#allocation3]
    $region5: #{tpu_custom_call.1} parent=1 // pred_fallthru
      _
    // Predicated region
    $region6: #{tpu_custom_call.1} parent=1 // pred_check
      _
    $region7: #{tpu_custom_call.1} parent=1 // pred_check_branch
      %24 = sbr.rel (0) target = $region9
    $region8: #{tpu_custom_call.1} parent=1 // pred_region
      %26 = vsyncadd [#allocation6], 0
      %s27 = sshll.u32 %s1, 4
      %s28 = int_to_ptr.hbm [resolvable:$true] %s27
      %s29 = sshll.u32 [#allocation5], 4
      %s30 = int_to_ptr.vmem [resolvable:$true] %s29
      %35 = dma.hbm_to_vmem [thread:$0]  %s28, 2048, %s30, [#allocation6], 128, 128, 8
    $region9: #{tpu_custom_call.1} parent=1 // pred_fallthru
      _
    // Predicated region
    $region10: #{tpu_custom_call.1} parent=1 // pred_check
      _
    $region11: #{tpu_custom_call.1} parent=1 // pred_check_branch
      %37 = sbr.rel (0) target = $region13
    $region12: #{tpu_custom_call.1} parent=1 // pred_region
      _
    $region13: #{tpu_custom_call.1} parent=1 // pred_fallthru
      _
    // Predicated region
    $region14: #{tpu_custom_call.1} parent=1 // pred_check
      _
    $region15: #{tpu_custom_call.1} parent=1 // pred_check_branch
      %39 = sbr.rel (0) target = $region17
    $region16: #{tpu_custom_call.1} parent=1 // pred_region
      _
    $region17: #{tpu_custom_call.1} parent=1 // pred_fallthru
      _
    // Predicated region
    $region18: #{tpu_custom_call.1} parent=1 // pred_check
      _
    $region19: #{tpu_custom_call.1} parent=1 // pred_check_branch
      %41 = sbr.rel (0) target = $region21
    $region20: #{tpu_custom_call.1} parent=1 // pred_region
      %43 = dma.done [#allocation3], 64
    $region21: #{tpu_custom_call.1} parent=1 // pred_fallthru
      _
    // Predicated region
    $region22: #{tpu_custom_call.1} parent=1 // pred_check
      _
    $region23: #{tpu_custom_call.1} parent=1 // pred_check_branch
      %45 = sbr.rel (0) target = $region25
    $region24: #{tpu_custom_call.1} parent=1 // pred_region
      %47 = dma.done [#allocation6], 2048
    $region25: #{tpu_custom_call.1} parent=1 // pred_fallthru
      _
    %v48 = vld [vmem:[#allocation2] sm:$0xf]
    %v49 = vld [vmem:[#allocation5] sm:$0xff]
    %v50 = vld [vmem:[#allocation5 + $0x8] sm:$0xff]
    %v51 = vld [vmem:[#allocation5 + $0x10] sm:$0xff]
    %v52 = vld [vmem:[#allocation5 + $0x18] sm:$0xff]
    %v53 = vld [vmem:[#allocation5 + $0x20] sm:$0xff]
    %v54 = vld [vmem:[#allocation5 + $0x28] sm:$0xff]
    %v55 = vld [vmem:[#allocation5 + $0x30] sm:$0xff]
    %v56 = vld [vmem:[#allocation5 + $0x38] sm:$0xff]
    %v57 = vld [vmem:[#allocation5 + $0x40] sm:$0xff]
    %v58 = vld [vmem:[#allocation5 + $0x48] sm:$0xff]
    %v59 = vld [vmem:[#allocation5 + $0x50] sm:$0xff]
    %v60 = vld [vmem:[#allocation5 + $0x58] sm:$0xff]
    %v61 = vld [vmem:[#allocation5 + $0x60] sm:$0xff]
    %v62 = vld [vmem:[#allocation5 + $0x68] sm:$0xff]
    %v63 = vld [vmem:[#allocation5 + $0x70] sm:$0xff]
    %v64 = vld [vmem:[#allocation5 + $0x78] sm:$0xff]
    %65 = vmatpush.msra.mxu0 %v64
    %66 = vmatpush.msra.mxu0 %v63
    %67 = vmatpush.msra.mxu0 %v62
    %68 = vmatpush.msra.mxu0 %v61
    %69 = vmatpush.msra.mxu0 %v60
    %70 = vmatpush.msra.mxu0 %v59
    %71 = vmatpush.msra.mxu0 %v58
    %72 = vmatpush.msra.mxu0 %v57
    %73 = vmatpush.msra.mxu0 %v56
    %74 = vmatpush.msra.mxu0 %v55
    %75 = vmatpush.msra.mxu0 %v54
    %76 = vmatpush.msra.mxu0 %v53
    %77 = vmatpush.msra.mxu0 %v52
    %78 = vmatpush.msra.mxu0 %v51
    %79 = vmatpush.msra.mxu0 %v50
    %80 = vmatpush.msra.mxu0 %v49
    %81 = vmatmul.f32.gmra.mxu0 %v48
    %v82 = vpop.f32.mrf.mxu0
    %v83 = vadd.f32 0.0, %v82
    %84 = vdwg.mxu0
    %v85 = vmul.f32 %v83, 0.03125
    %v86 = vsub.f32 %v48, %v85
    %v87 = vmul.f32 %v86, %v86
    %88 = vmatpush.msra.mxu0 %v64
    %89 = vmatpush.msra.mxu0 %v63
    %90 = vmatpush.msra.mxu0 %v62
    %91 = vmatpush.msra.mxu0 %v61
    %92 = vmatpush.msra.mxu0 %v60
    %93 = vmatpush.msra.mxu0 %v59
    %94 = vmatpush.msra.mxu0 %v58
    %95 = vmatpush.msra.mxu0 %v57
    %96 = vmatpush.msra.mxu0 %v56
    %97 = vmatpush.msra.mxu0 %v55
    %98 = vmatpush.msra.mxu0 %v54
    %99 = vmatpush.msra.mxu0 %v53
    %100 = vmatpush.msra.mxu0 %v52
    %101 = vmatpush.msra.mxu0 %v51
    %102 = vmatpush.msra.mxu0 %v50
    %103 = vmatpush.msra.mxu0 %v49
    %104 = vmatmul.f32.gmra.mxu0 %v87
    %v105 = vpop.f32.mrf.mxu0
    %v106 = vadd.f32 0.0, %v105
    %107 = vdwg.mxu0
    %v108 = vmul.f32 %v106, 0.032258064
    %v109 = vadd.f32 %v108, 1e-06
    %v110 = vrsqrt.pop %v109
    %v111 = vmul.f32 %v110, %v109
    %v112 = vmul.f32 %v111, %v110
    %v113 = vmul.f32 0.5, %v112
    %v114 = vsub.f32 1.5, %v113
    %v115 = vmul.f32 %v110, %v114
    %vm116 = vweird.f32 %v109
    %vm117 = vweird.f32 %v110
    %vm118 = vmor %vm116, %vm117
    %v119 = vsel %vm118, %v110, %v115
    %v120 = vld [vmem:[%s2] sm:$0x1]
    %v121 = vmul.f32 %v86, %v119
    %v123 = vperm.slane %v120, 0
    %v125 = vmul.f32 %v123, %v121
    %v126 = vld [vmem:[%s3] sm:$0x1]
    %v128 = vperm.slane %v126, 0
    %v130 = vadd.f32 %v125, %v128
    %131 = vst [vmem:[#allocation7] sm:$0xf] %v130
    // Predicated region
    $region26: #{tpu_custom_call.1} parent=1 // pred_check
      _
    $region27: #{tpu_custom_call.1} parent=1 // pred_check_branch
      %133 = sbr.rel (0) target = $region29
    $region28: #{tpu_custom_call.1} parent=1 // pred_region
      %135 = vsyncadd [#allocation4], 0
      %s137 = sshll.u32 [#allocation7], 4
      %s138 = int_to_ptr.vmem [resolvable:$true] %s137
      %s139 = sshll.u32 %s4, 4
      %s140 = int_to_ptr.hbm [resolvable:$true] %s139
      %142 = dma.vmem_to_hbm [thread:$0]  %s138, 64, %s140, [#allocation4]
    $region29: #{tpu_custom_call.1} parent=1 // pred_fallthru
      _
    // Predicated region
    $region30: #{tpu_custom_call.1} parent=1 // pred_check
      _
    $region31: #{tpu_custom_call.1} parent=1 // pred_check_branch
      %144 = sbr.rel (0) target = $region33
    $region32: #{tpu_custom_call.1} parent=1 // pred_region
      %146 = dma.done [#allocation4], 64
    $region33: #{tpu_custom_call.1} parent=1 // pred_fallthru
      _
    %147 = vsyncpa [#allocation3], 1
    %148 = vsyncpa [#allocation6], 1
    %149 = vsyncpa [#allocation4], 1

</llo_original>
